<compile_context>
chip_gen: v6e
topology: v6e:2x2x1
jax: 0.10.0
libtpu: 0.0.40
codegen_flags: <defaults>
</compile_context>

<pallas_src>
import jax
import jax.numpy as jnp
from jax.experimental import pallas as pl
from jax.experimental.pallas import tpu as pltpu

_LANE = 128


def _copy_kernel(x_ref, o_ref):
    # Pure DMA-fed copy: input and output tiles have identical lane-dense
    # layout, so this lowers to unmasked vld/vst with no relayout.
    o_ref[...] = x_ref[...]


def _sublane_multiple(dtype):
    """Rows per fully-packed vreg sublane group for this dtype."""
    itemsize = jnp.dtype(dtype).itemsize
    # 32-bit -> 8 rows, bf16/fp16 -> 16 rows, int8/fp8 -> 32 rows.
    return max(8, 8 * (4 // max(1, itemsize)))


def _choose_2d_layout(total, sublane):
    """Pick a lane-dense (and if possible sublane-dense) (rows, cols) factoring."""
    # Prefer cols that are a multiple of 128 AND leave rows a multiple of the
    # dtype's sublane packing factor.
    for cols in (4096, 2048, 1024, 512, 256, 128):
        if total % cols == 0 and (total // cols) % sublane == 0:
            return total // cols, cols
    # Next best: lane-dense only.
    for cols in (4096, 2048, 1024, 512, 256, 128):
        if total % cols == 0:
            return total // cols, cols
    return None


def _choose_row_tile(rows, cols, itemsize, sublane):
    """~8 MiB per block, sublane-aligned, and >= 2 grid steps when possible."""
    target_bytes = 8 << 20
    t = max(sublane, (target_bytes // (cols * itemsize) // sublane) * sublane)
    t = min(t, rows)
    # v7x megacore: dimension_semantics=("parallel",) only shards the grid
    # across the two TensorCores when it has >= 2 iterations.
    if t >= rows and rows >= 2 * sublane:
        half = -(-rows // 2)  # cdiv(rows, 2)
        t = ((half + sublane - 1) // sublane) * sublane
        if t >= rows:
            t = max(sublane, rows - sublane)
    return t


def flatten(x, keep_batch_dim=True):
    """Pallas equivalent of Flatten.forward (torch .view semantics)."""
    b = x.shape[0]
    total = 1
    for d in x.shape:
        total *= d
    flat = total // b

    sublane = _sublane_multiple(x.dtype)
    itemsize = jnp.dtype(x.dtype).itemsize

    # Metadata-level collapse in the wrapper (free in XLA); the kernel only
    # ever sees a dense 2D slab.
    layout = _choose_2d_layout(total, sublane)
    if layout is None:
        # A last dim that is not a multiple of 128 would lower to masked
        # vst.msk partial stores; Flatten is pure metadata, so skip the copy.
        return x.reshape(b, flat) if keep_batch_dim else x.reshape(-1)

    rows, cols = layout
    x2d = x.reshape(rows, cols)

    row_tile = _choose_row_tile(rows, cols, itemsize, sublane)
    grid = (pl.cdiv(rows, row_tile),)

    out2d = pl.pallas_call(
        _copy_kernel,
        out_shape=jax.ShapeDtypeStruct((rows, cols), x.dtype),
        grid=grid,
        in_specs=[pl.BlockSpec((row_tile, cols), lambda i: (i, 0))],
        out_specs=pl.BlockSpec((row_tile, cols), lambda i: (i, 0)),
        compiler_params=pltpu.CompilerParams(
            dimension_semantics=("parallel",),
            # 2 arrays x 2 buffers x <=8 MiB blocks = <=32 MiB; 40 MiB gives
            # headroom and stays under v7x's 64 MiB physical VMEM.
            vmem_limit_bytes=40 << 20,
        ),
    )(x2d)

    # TODO(synk): in a real model this standalone copy should be dropped or
    # fused into the consumer kernel (or aliased via input_output_aliases) —
    # Flatten is free metadata; the pallas_call is kept only because an
    # explicit kernel is required here.
    if keep_batch_dim:
        return out2d.reshape(b, flat)
    return out2d.reshape(-1)


if __name__ == "__main__":
    key = jax.random.PRNGKey(0)
    x = jax.random.normal(key, (2, 4, 16, 16), dtype=jnp.float32)

    # keep_batch_dim=True (module default): (B, C, H, W) -> (B, C*H*W)
    y = jax.block_until_ready(flatten(x, keep_batch_dim=True))
    assert y.shape == (2, 4 * 16 * 16)
    assert jnp.allclose(y, x.reshape(2, -1)), "flatten(keep_batch_dim=True) mismatch"

    # keep_batch_dim=False: (B, C, H, W) -> (B*C*H*W,)
    y_flat = jax.block_until_ready(flatten(x, keep_batch_dim=False))
    assert y_flat.shape == (2 * 4 * 16 * 16,)
    assert jnp.allclose(y_flat, x.reshape(-1)), "flatten(keep_batch_dim=False) mismatch"

    print("KERNEL_OK")
</pallas_src>

<mosaic_0001>
module attributes {stable_mosaic.version = 11 : i64} {
  func.func @_copy_kernel(%arg0: i32, %arg1: memref<8x256xf32, #tpu.memory_space<vmem>>, %arg2: memref<8x256xf32, #tpu.memory_space<vmem>>) attributes {dimension_semantics = [#tpu.dimension_semantics<parallel>], iteration_bounds = array<i64: 1>, scalar_prefetch = 0 : i64, scratch_operands = 0 : i64, tpu.core_type = #tpu.core_type<tc>, window_params = [{transform_indices = @transform_0, window_bounds = array<i64: 8, 256>}, {transform_indices = @transform_1, window_bounds = array<i64: 8, 256>}]} {
    %c0 = arith.constant 0 : index
    %c0_0 = arith.constant 0 : index
    %0 = vector.load %arg1[%c0, %c0_0] : memref<8x256xf32, #tpu.memory_space<vmem>>, vector<8x256xf32>
    %c0_1 = arith.constant 0 : index
    %c0_2 = arith.constant 0 : index
    %1 = vector.load %arg2[%c0_1, %c0_2] : memref<8x256xf32, #tpu.memory_space<vmem>>, vector<8x256xf32>
    tpu.vector_store %arg2[%c0_1, %c0_2], %0 {strides = array<i32>} : memref<8x256xf32, #tpu.memory_space<vmem>>, vector<8x256xf32>,
    return
  }
  func.func @transform_0(%arg0: i32) -> (i32, i32) {
    %c0_i32 = arith.constant 0 : i32
    %c0_i32_0 = arith.constant 0 : i32
    return %arg0, %c0_i32 : i32, i32
  }
  func.func @transform_1(%arg0: i32) -> (i32, i32) {
    %c0_i32 = arith.constant 0 : i32
    %c0_i32_0 = arith.constant 0 : i32
    return %arg0, %c0_i32 : i32, i32
  }
}

</mosaic_0001>

<llo_original>
// kernel: tpu_custom_call.1
$region0: #{tpu_custom_call.1}
  #allocation0 [shape = 'u32[]', space=smem, size = 0x4, offset = 0x4, fixed_abs, tag = 'smem constant byte address 0x4 - core index']
  #allocation1 [shape = 'u32[144,128]{1,0:T(1,128)}', space=vmem, size = 0x12000, scoped, tag = 'internal scratch']
  %s0 = inlined_call_operand.hbm [shape: f32[8,256], index: 0, kind: input, shape index: {}]
  %s1 = inlined_call_operand.hbm [shape: f32[8,256], index: 1, kind: output, shape index: {}]
  %s2 = sld [smem:[#allocation0]]
  $region18: #{tpu_custom_call.1} parent=0
    _
  %s4 = ssub.s32 1, %s2
  %s5 = scalar_select 0, %s4, %s2
  $region1: #{tpu_custom_call.1} parent=0
    #allocation2 [shape = 'u8[8192]{0}', space=vmem, size = 0x2000, scoped, tag = 'input window, operand 0, single buffered']
    #allocation3 [shape = 's32[1]{0}', space=sflag, size = 0x4, scoped, tag = 'scoped memory for tpu_custom_call.1']
    #allocation4 [shape = 's32[1]{0}', space=sflag, size = 0x4, scoped, tag = 'scoped memory for tpu_custom_call.1']
    #allocation5 [shape = 'u8[8192]{0}', space=vmem, size = 0x2000, scoped, tag = 'output window, operand 0, single buffered']
    %6 = vsyncpa [#allocation3], 0
    %7 = vsyncpa [#allocation4], 0
    // Predicated region
    $region2: #{tpu_custom_call.1} parent=1 // pred_check
      _
    $region3: #{tpu_custom_call.1} parent=1 // pred_check_branch
      %9 = sbr.rel (0) target = $region5
    $region4: #{tpu_custom_call.1} parent=1 // pred_region
      %s11 = ssub.s32 256, 256
      %12 = vsyncadd [#allocation3], %s11
      %s14 = sshll.u32 [#allocation2], 4
      %s15 = int_to_ptr.vmem [resolvable:$true] %s14
      %17 = dma.hbm_to_vmem [thread:$0]  %s0, 256, %s15, [#allocation3]
    $region5: #{tpu_custom_call.1} parent=1 // pred_fallthru
      _
    // Predicated region
    $region6: #{tpu_custom_call.1} parent=1 // pred_check
      _
    $region7: #{tpu_custom_call.1} parent=1 // pred_check_branch
      %19 = sbr.rel (0) target = $region9
    $region8: #{tpu_custom_call.1} parent=1 // pred_region
      %20 = dma.done [#allocation3], 256
    $region9: #{tpu_custom_call.1} parent=1 // pred_fallthru
      _
    %v21 = vld [vmem:[#allocation2] sm:$0xff]
    %v22 = vld [vmem:[#allocation2 + $0x8] sm:$0xff]
    %23 = vst [vmem:[#allocation5] sm:$0xff] %v21
    %24 = vst [vmem:[#allocation5 + $0x8] sm:$0xff] %v22
    // Predicated region
    $region10: #{tpu_custom_call.1} parent=1 // pred_check
      _
    $region11: #{tpu_custom_call.1} parent=1 // pred_check_branch
      %26 = sbr.rel (0) target = $region13
    $region12: #{tpu_custom_call.1} parent=1 // pred_region
      %s28 = ssub.s32 256, 256
      %29 = vsyncadd [#allocation4], %s28
      %s31 = sshll.u32 [#allocation5], 4
      %s32 = int_to_ptr.vmem [resolvable:$true] %s31
      %34 = dma.vmem_to_hbm [thread:$0]  %s32, 256, %s1, [#allocation4]
    $region13: #{tpu_custom_call.1} parent=1 // pred_fallthru
      _
    // Predicated region
    $region14: #{tpu_custom_call.1} parent=1 // pred_check
      _
    $region15: #{tpu_custom_call.1} parent=1 // pred_check_branch
      %36 = sbr.rel (0) target = $region17
    $region16: #{tpu_custom_call.1} parent=1 // pred_region
      %37 = dma.done [#allocation4], 256
    $region17: #{tpu_custom_call.1} parent=1 // pred_fallthru
      _
    %38 = vsyncpa [#allocation3], 1
    %39 = vsyncpa [#allocation4], 1

</llo_original>
